<compile_context>
chip_gen: v5e
topology: v5e:2x2
jax: 0.10.0
libtpu: 0.0.40
codegen_flags: <defaults>
</compile_context>

<pallas_src>
import jax
import jax.numpy as jnp
from jax.experimental import pallas as pl
from jax.experimental.pallas import tpu as pltpu


def _round_up(x, m):
    return (x + m - 1) // m * m


def highway_kernel(x_ref, w_ref, b_ref, o_ref):
    x = x_ref[...]                                           # (tb, Hp)
    hp = x.shape[1]
    # One fused MXU pass: (tb, Hp) @ (Hp, 2*Hp) -> (tb, 2*Hp), f32 accumulate.
    y = jnp.dot(x, w_ref[...], preferred_element_type=jnp.float32) + b_ref[...]
    hl = y[:, :hp]                                           # H-branch
    cl = jax.nn.sigmoid(y[:, hp:])                           # T-gate (EUP)
    xf = x.astype(jnp.float32)
    # hl*(1-cl) + x*cl  ==  hl + cl*(x - hl)   (one fewer VPU mul/sub)
    h = hl + cl * (xf - hl)
    o_ref[...] = jnp.maximum(h, 0.0).astype(o_ref.dtype)


def prepare_highway_params(w_h, b_h, w_t, b_t, *, param_dtype=None):
    """Fuse + transpose + lane-pad the parameters ONCE, outside the hot path.

    w_h, w_t: (H, H) in torch nn.Linear layout (out, in).  b_*: (H,).
    Returns (w_cat, b_cat, H, Hp) with w_cat: (Hp, 2*Hp), b_cat: (1, 2*Hp).
    """
    H = w_h.shape[0]
    Hp = _round_up(H, 128)                       # lane-dense hidden dim
    dt = param_dtype if param_dtype is not None else w_h.dtype

    # (in, out) layout so the kernel does x @ W; concat the two heads on the
    # output axis -> (H, 2H), columns [0:H] = W_H^T, [H:2H] = W_T^T.
    w_cat = jnp.concatenate([w_h.T, w_t.T], axis=1)          # (H, 2H)
    # Pad each head's output block H->Hp and the input dim H->Hp (zeros).
    w_cat = w_cat.reshape(H, 2, H)
    w_cat = jnp.pad(w_cat, ((0, Hp - H), (0, 0), (0, Hp - H)))
    w_cat = w_cat.reshape(Hp, 2 * Hp).astype(dt)

    b_cat = jnp.stack([b_h, b_t], axis=0)                    # (2, H)
    b_cat = jnp.pad(b_cat, ((0, 0), (0, Hp - H)))
    b_cat = b_cat.reshape(1, 2 * Hp).astype(jnp.float32)     # keep bias f32
    return w_cat, b_cat, H, Hp


def highway_block(x, w_cat, b_cat, H, Hp, *, tile_b=None):
    """x: (B, H) float32.  w_cat/b_cat from prepare_highway_params."""
    B = x.shape[0]
    if tile_b is None:
        # Largest batch tile up to 512 rows (multiple of 8) -> several
        # pipelined, megacore-parallel grid steps for real batch sizes.
        tile_b = min(_round_up(B, 8), 512)
    tile_b = _round_up(tile_b, 8)
    Bp = _round_up(B, tile_b)

    xp = x
    if Bp != B or Hp != H:
        xp = jnp.pad(x, ((0, Bp - B), (0, Hp - H)))

    itemsize = xp.dtype.itemsize
    w_bytes = w_cat.size * w_cat.dtype.itemsize
    b_bytes = 8 * 2 * Hp * 4                      # sublane-padded bias block
    tile_bytes = tile_b * Hp * itemsize
    # resident weights/bias + double-buffered x and out tiles, with headroom;
    # cap at 64 MiB so the same config stays valid on v7x.
    needed = w_bytes + b_bytes + 2 * (2 * tile_bytes)
    vmem_limit = min(max(2 * needed, 32 << 20), 64 << 20)

    cost = pl.CostEstimate(
        flops=2 * Bp * Hp * (2 * Hp),             # one (Bp,Hp)x(Hp,2Hp) matmul
        transcendentals=Bp * Hp,                  # sigmoid
        bytes_accessed=xp.size * itemsize + Bp * Hp * itemsize
        + w_bytes + b_cat.size * 4,
    )

    grid = (Bp // tile_b,)
    out = pl.pallas_call(
        highway_kernel,
        out_shape=jax.ShapeDtypeStruct((Bp, Hp), x.dtype),
        grid_spec=pltpu.PrefetchScalarGridSpec(
            num_scalar_prefetch=0,
            grid=grid,
            in_specs=[
                pl.BlockSpec((tile_b, Hp), lambda i: (i, 0)),   # x tile
                pl.BlockSpec((Hp, 2 * Hp), lambda i: (0, 0)),   # fused W (resident)
                pl.BlockSpec((1, 2 * Hp), lambda i: (0, 0)),    # fused bias
            ],
            out_specs=pl.BlockSpec((tile_b, Hp), lambda i: (i, 0)),
        ),
        compiler_params=pltpu.CompilerParams(
            dimension_semantics=("parallel",),
            vmem_limit_bytes=vmem_limit,
        ),
        cost_estimate=cost,
    )(xp, w_cat, b_cat)

    if Bp != B or Hp != H:
        out = out[:B, :H]
    return out


def highway_ref(x, w_h, b_h, w_t, b_t):
    hl = x @ w_h.T + b_h
    cl = jax.nn.sigmoid(x @ w_t.T + b_t)
    h = hl * (1 - cl) + x * cl
    return jnp.maximum(h, 0.0)


if __name__ == "__main__":
    hidden_size = 32
    batch = 8

    key = jax.random.PRNGKey(0)
    kx, kwh, kbh, kwt, kbt = jax.random.split(key, 5)

    # Deterministic parameter init (mimics nn.Linear's uniform(-1/sqrt(H), 1/sqrt(H)))
    bound = 1.0 / (hidden_size ** 0.5)
    w_h = jax.random.uniform(kwh, (hidden_size, hidden_size), jnp.float32, -bound, bound)
    b_h = jax.random.uniform(kbh, (hidden_size,), jnp.float32, -bound, bound)
    w_t = jax.random.uniform(kwt, (hidden_size, hidden_size), jnp.float32, -bound, bound)
    b_t = jax.random.uniform(kbt, (hidden_size,), jnp.float32, -bound, bound)

    x = jax.random.normal(kx, (batch, hidden_size), jnp.float32)

    # One-time parameter prep (transpose + fuse + lane-pad), outside hot path.
    # For large H on v6e/v7x pass param_dtype=jnp.bfloat16 here.
    w_cat, b_cat, H, Hp = prepare_highway_params(w_h, b_h, w_t, b_t)

    out = highway_block(x, w_cat, b_cat, H, Hp)
    out = jax.block_until_ready(out)

    ref = highway_ref(x, w_h, b_h, w_t, b_t)
    assert out.shape == (batch, hidden_size)
    assert jnp.allclose(out, ref, atol=1e-5, rtol=1e-5), "mismatch vs reference"

    print("KERNEL_OK")
</pallas_src>

<mosaic_0001>
module attributes {stable_mosaic.version = 11 : i64} {
  func.func @highway_kernel(%arg0: i32, %arg1: memref<8x128xf32, #tpu.memory_space<vmem>>, %arg2: memref<128x256xf32, #tpu.memory_space<vmem>>, %arg3: memref<1x256xf32, #tpu.memory_space<vmem>>, %arg4: memref<8x128xf32, #tpu.memory_space<vmem>>) attributes {dimension_semantics = [#tpu.dimension_semantics<parallel>], iteration_bounds = array<i64: 1>, scalar_prefetch = 0 : i64, scratch_operands = 0 : i64, tpu.core_type = #tpu.core_type<tc>, window_params = [{transform_indices = @transform_0, window_bounds = array<i64: 8, 128>}, {pipeline_mode = #tpu.pipeline_mode<synchronous>, transform_indices = @transform_1, window_bounds = array<i64: 128, 256>}, {pipeline_mode = #tpu.pipeline_mode<synchronous>, transform_indices = @transform_2, window_bounds = array<i64: 1, 256>}, {transform_indices = @transform_3, window_bounds = array<i64: 8, 128>}]} {
    %c0 = arith.constant 0 : index
    %c0_0 = arith.constant 0 : index
    %0 = vector.load %arg1[%c0, %c0_0] : memref<8x128xf32, #tpu.memory_space<vmem>>, vector<8x128xf32>
    %c0_1 = arith.constant 0 : index
    %c0_2 = arith.constant 0 : index
    %1 = vector.load %arg2[%c0_1, %c0_2] : memref<128x256xf32, #tpu.memory_space<vmem>>, vector<128x256xf32>
    %cst = arith.constant dense<0.000000e+00> : vector<8x256xf32>
    %2 = tpu.matmul %0, %1, %cst {dimension_numbers = #tpu.dot_dimension_numbers<[1], [0], [0], [1], [0, 0, 1, 1], [], []>} : vector<8x128xf32>, vector<128x256xf32>, vector<8x256xf32> -> vector<8x256xf32>
    %c0_3 = arith.constant 0 : index
    %c0_4 = arith.constant 0 : index
    %3 = vector.load %arg3[%c0_3, %c0_4] : memref<1x256xf32, #tpu.memory_space<vmem>>, vector<1x256xf32>
    %4 = vector.broadcast %3 : vector<1x256xf32> to vector<8x256xf32>
    %5 = arith.addf %2, %4 : vector<8x256xf32>
    %6 = vector.extract_strided_slice %5 {offsets = [0, 0], sizes = [8, 128], strides = [1, 1]} : vector<8x256xf32> to vector<8x128xf32>
    %7 = vector.extract_strided_slice %5 {offsets = [0, 128], sizes = [8, 128], strides = [1, 1]} : vector<8x256xf32> to vector<8x128xf32>
    %8 = arith.negf %7 : vector<8x128xf32>
    %9 = math.exp %8 : vector<8x128xf32>
    %cst_5 = arith.constant 1.000000e+00 : f32
    %10 = vector.broadcast %cst_5 : f32 to vector<8x128xf32>
    %11 = arith.addf %10, %9 : vector<8x128xf32>
    %12 = arith.divf %10, %11 : vector<8x128xf32>
    %13 = arith.subf %0, %6 : vector<8x128xf32>
    %14 = arith.mulf %12, %13 : vector<8x128xf32>
    %15 = arith.addf %6, %14 : vector<8x128xf32>
    %cst_6 = arith.constant 0.000000e+00 : f32
    %16 = vector.broadcast %cst_6 : f32 to vector<8x128xf32>
    %17 = arith.maximumf %15, %16 : vector<8x128xf32>
    %c0_7 = arith.constant 0 : index
    %c0_8 = arith.constant 0 : index
    %18 = vector.load %arg4[%c0_7, %c0_8] : memref<8x128xf32, #tpu.memory_space<vmem>>, vector<8x128xf32>
    tpu.vector_store %arg4[%c0_7, %c0_8], %17 {strides = array<i32>} : memref<8x128xf32, #tpu.memory_space<vmem>>, vector<8x128xf32>,
    return
  }
  func.func @transform_0(%arg0: i32) -> (i32, i32) {
    %c0_i32 = arith.constant 0 : i32
    %c0_i32_0 = arith.constant 0 : i32
    return %arg0, %c0_i32 : i32, i32
  }
  func.func @transform_1(%arg0: i32) -> (i32, i32) {
    %c0_i32 = arith.constant 0 : i32
    %c0_i32_0 = arith.constant 0 : i32
    %c0_i32_1 = arith.constant 0 : i32
    return %c0_i32, %c0_i32_0 : i32, i32
  }
  func.func @transform_2(%arg0: i32) -> (i32, i32) {
    %c0_i32 = arith.constant 0 : i32
    %c0_i32_0 = arith.constant 0 : i32
    %c0_i32_1 = arith.constant 0 : i32
    return %c0_i32, %c0_i32_0 : i32, i32
  }
  func.func @transform_3(%arg0: i32) -> (i32, i32) {
    %c0_i32 = arith.constant 0 : i32
    %c0_i32_0 = arith.constant 0 : i32
    return %arg0, %c0_i32 : i32, i32
  }
}

</mosaic_0001>

<llo_original>
// kernel: tpu_custom_call.1
$region0: #{tpu_custom_call.1}
  #allocation0 [shape = 'u32[]', space=smem, size = 0x4, offset = 0x4, fixed_abs, tag = 'smem constant byte address 0x4 - core index']
  #allocation1 [shape = 'u32[72,128]{1,0:T(1,128)}', space=vmem, size = 0x9000, scoped, tag = 'internal scratch']
  %s0 = inlined_call_operand.hbm [shape: f32[8,128], index: 0, kind: input, shape index: {}]
  %s1 = inlined_call_operand.hbm [shape: f32[128,256], index: 1, kind: input, shape index: {}]
  %s2 = inlined_call_operand.hbm [shape: f32[1,256], index: 2, kind: input, shape index: {}]
  %s3 = inlined_call_operand.hbm [shape: f32[8,128], index: 3, kind: output, shape index: {}]
  %s4 = sld [smem:[#allocation0]]
  $region34: #{tpu_custom_call.1} parent=0
    _
  %s6 = ssub.s32 1, %s4
  %s7 = scalar_select 0, %s6, %s4
  $region1: #{tpu_custom_call.1} parent=0
    #allocation2 [shape = 'u8[4096]{0}', space=vmem, size = 0x1000, scoped, tag = 'input window, operand 0, single buffered']
    #allocation3 [shape = 's32[1]{0}', space=sflag, size = 0x4, scoped, tag = 'scoped memory for tpu_custom_call.1']
    #allocation4 [shape = 's32[1]{0}', space=sflag, size = 0x4, scoped, tag = 'scoped memory for tpu_custom_call.1']
    #allocation5 [shape = 'u8[131072]{0}', space=vmem, size = 0x20000, scoped, tag = 'input window, operand 1, single buffered']
    #allocation6 [shape = 's32[1]{0}', space=sflag, size = 0x4, scoped, tag = 'scoped memory for tpu_custom_call.1']
    #allocation7 [shape = 'u8[1024]{0}', space=vmem, size = 0x400, scoped, tag = 'input window, operand 2, single buffered']
    #allocation8 [shape = 'u8[4096]{0}', space=vmem, size = 0x1000, scoped, tag = 'output window, operand 0, single buffered']
    %8 = vsyncpa [#allocation3], 0
    %9 = vsyncpa [#allocation6], 0
    %10 = vsyncpa [#allocation4], 0
    // Predicated region
    $region2: #{tpu_custom_call.1} parent=1 // pred_check
      _
    $region3: #{tpu_custom_call.1} parent=1 // pred_check_branch
      %12 = sbr.rel (0) target = $region5
    $region4: #{tpu_custom_call.1} parent=1 // pred_region
      %14 = vsyncadd [#allocation3], 0
      %s16 = sshll.u32 %s0, 4
      %s17 = int_to_ptr.hbm [resolvable:$true] %s16
      %s18 = sshll.u32 [#allocation2], 4
      %s19 = int_to_ptr.vmem [resolvable:$true] %s18
      %21 = dma.hbm_to_vmem [thread:$0]  %s17, 128, %s19, [#allocation3]
    $region5: #{tpu_custom_call.1} parent=1 // pred_fallthru
      _
    // Predicated region
    $region6: #{tpu_custom_call.1} parent=1 // pred_check
      _
    $region7: #{tpu_custom_call.1} parent=1 // pred_check_branch
      %23 = sbr.rel (0) target = $region9
    $region8: #{tpu_custom_call.1} parent=1 // pred_region
      %25 = vsyncadd [#allocation6], 0
      %s26 = sshll.u32 %s1, 4
      %s27 = int_to_ptr.hbm [resolvable:$true] %s26
      %s28 = sshll.u32 [#allocation5], 4
      %s29 = int_to_ptr.vmem [resolvable:$true] %s28
      %34 = dma.hbm_to_vmem [thread:$0]  %s27, 4096, %s29, [#allocation6], 256, 256, 16
    $region9: #{tpu_custom_call.1} parent=1 // pred_fallthru
      _
    // Predicated region
    $region10: #{tpu_custom_call.1} parent=1 // pred_check
      _
    $region11: #{tpu_custom_call.1} parent=1 // pred_check_branch
      %36 = sbr.rel (0) target = $region13
    $region12: #{tpu_custom_call.1} parent=1 // pred_region
      %38 = vsyncadd [#allocation6], 0
      %s40 = sshll.u32 %s2, 4
      %s41 = int_to_ptr.hbm [resolvable:$true] %s40
      %s42 = sshll.u32 [#allocation7], 4
      %s43 = int_to_ptr.vmem [resolvable:$true] %s42
      %45 = dma.hbm_to_vmem [thread:$0]  %s41, 32, %s43, [#allocation6]
    $region13: #{tpu_custom_call.1} parent=1 // pred_fallthru
      _
    // Predicated region
    $region14: #{tpu_custom_call.1} parent=1 // pred_check
      _
    $region15: #{tpu_custom_call.1} parent=1 // pred_check_branch
      %47 = sbr.rel (0) target = $region17
    $region16: #{tpu_custom_call.1} parent=1 // pred_region
      %49 = dma.done [#allocation3], 128
    $region17: #{tpu_custom_call.1} parent=1 // pred_fallthru
      _
    // Predicated region
    $region18: #{tpu_custom_call.1} parent=1 // pred_check
      _
    $region19: #{tpu_custom_call.1} parent=1 // pred_check_branch
      %51 = sbr.rel (0) target = $region21
    $region20: #{tpu_custom_call.1} parent=1 // pred_region
      %53 = dma.done [#allocation6], 4096
    $region21: #{tpu_custom_call.1} parent=1 // pred_fallthru
      _
    // Predicated region
    $region22: #{tpu_custom_call.1} parent=1 // pred_check
      _
    $region23: #{tpu_custom_call.1} parent=1 // pred_check_branch
      %55 = sbr.rel (0) target = $region25
    $region24: #{tpu_custom_call.1} parent=1 // pred_region
      %57 = dma.done [#allocation6], 32
    $region25: #{tpu_custom_call.1} parent=1 // pred_fallthru
      _
    %v58 = vld [vmem:[#allocation2] sm:$0xff]
    %v59 = vld [vmem:[#allocation5] sm:$0xff]
    %v60 = vld [vmem:[#allocation5 + $0x8] sm:$0xff]
    %v61 = vld [vmem:[#allocation5 + $0x10] sm:$0xff]
    %v62 = vld [vmem:[#allocation5 + $0x18] sm:$0xff]
    %v63 = vld [vmem:[#allocation5 + $0x20] sm:$0xff]
    %v64 = vld [vmem:[#allocation5 + $0x28] sm:$0xff]
    %v65 = vld [vmem:[#allocation5 + $0x30] sm:$0xff]
    %v66 = vld [vmem:[#allocation5 + $0x38] sm:$0xff]
    %v67 = vld [vmem:[#allocation5 + $0x40] sm:$0xff]
    %v68 = vld [vmem:[#allocation5 + $0x48] sm:$0xff]
    %v69 = vld [vmem:[#allocation5 + $0x50] sm:$0xff]
    %v70 = vld [vmem:[#allocation5 + $0x58] sm:$0xff]
    %v71 = vld [vmem:[#allocation5 + $0x60] sm:$0xff]
    %v72 = vld [vmem:[#allocation5 + $0x68] sm:$0xff]
    %v73 = vld [vmem:[#allocation5 + $0x70] sm:$0xff]
    %v74 = vld [vmem:[#allocation5 + $0x78] sm:$0xff]
    %v75 = vld [vmem:[#allocation5 + $0x80] sm:$0xff]
    %v76 = vld [vmem:[#allocation5 + $0x88] sm:$0xff]
    %v77 = vld [vmem:[#allocation5 + $0x90] sm:$0xff]
    %v78 = vld [vmem:[#allocation5 + $0x98] sm:$0xff]
    %v79 = vld [vmem:[#allocation5 + $0xa0] sm:$0xff]
    %v80 = vld [vmem:[#allocation5 + $0xa8] sm:$0xff]
    %v81 = vld [vmem:[#allocation5 + $0xb0] sm:$0xff]
    %v82 = vld [vmem:[#allocation5 + $0xb8] sm:$0xff]
    %v83 = vld [vmem:[#allocation5 + $0xc0] sm:$0xff]
    %v84 = vld [vmem:[#allocation5 + $0xc8] sm:$0xff]
    %v85 = vld [vmem:[#allocation5 + $0xd0] sm:$0xff]
    %v86 = vld [vmem:[#allocation5 + $0xd8] sm:$0xff]
    %v87 = vld [vmem:[#allocation5 + $0xe0] sm:$0xff]
    %v88 = vld [vmem:[#allocation5 + $0xe8] sm:$0xff]
    %v89 = vld [vmem:[#allocation5 + $0xf0] sm:$0xff]
    %v90 = vld [vmem:[#allocation5 + $0xf8] sm:$0xff]
    %v91 = vld [vmem:[#allocation7] sm:$0x3]
    %v93 = vperm.slane %v91, 0
    %v94 = vperm.slane %v91, 1
    %97 = vmatpush.msra.mxu0 %v89
    %98 = vmatpush.msra.mxu0 %v87
    %99 = vmatpush.msra.mxu0 %v85
    %100 = vmatpush.msra.mxu0 %v83
    %101 = vmatpush.msra.mxu0 %v81
    %102 = vmatpush.msra.mxu0 %v79
    %103 = vmatpush.msra.mxu0 %v77
    %104 = vmatpush.msra.mxu0 %v75
    %105 = vmatpush.msra.mxu0 %v73
    %106 = vmatpush.msra.mxu0 %v71
    %107 = vmatpush.msra.mxu0 %v69
    %108 = vmatpush.msra.mxu0 %v67
    %109 = vmatpush.msra.mxu0 %v65
    %110 = vmatpush.msra.mxu0 %v63
    %111 = vmatpush.msra.mxu0 %v61
    %112 = vmatpush.msra.mxu0 %v59
    %113 = vmatmul.f32.gmra.mxu0 %v58
    %v114 = vpop.f32.mrf.mxu0
    %v115 = vadd.f32 %v93, %v114
    %116 = vdwg.mxu0
    %117 = vmatpush.msra.mxu0 %v90
    %118 = vmatpush.msra.mxu0 %v88
    %119 = vmatpush.msra.mxu0 %v86
    %120 = vmatpush.msra.mxu0 %v84
    %121 = vmatpush.msra.mxu0 %v82
    %122 = vmatpush.msra.mxu0 %v80
    %123 = vmatpush.msra.mxu0 %v78
    %124 = vmatpush.msra.mxu0 %v76
    %125 = vmatpush.msra.mxu0 %v74
    %126 = vmatpush.msra.mxu0 %v72
    %127 = vmatpush.msra.mxu0 %v70
    %128 = vmatpush.msra.mxu0 %v68
    %129 = vmatpush.msra.mxu0 %v66
    %130 = vmatpush.msra.mxu0 %v64
    %131 = vmatpush.msra.mxu0 %v62
    %132 = vmatpush.msra.mxu0 %v60
    %133 = vmatmul.f32.gmra.mxu0 %v58
    %v134 = vpop.f32.mrf.mxu0
    %v135 = vadd.f32 %v94, %v134
    %136 = vdwg.mxu0
    %v137 = vxor.u32 %v135, 2147483648
    %v138 = vmul.f32 %v137, 1.442695
    %v139 = vpow.pop %v138
    %v140 = vadd.f32 %v139, 1.0
    %v141 = vrcp.pop %v140
    %v142 = vmul.f32 %v140, %v141
    %v143 = vsub.f32 1.0, %v142
    %v144 = vmul.f32 %v141, %v143
    %v145 = vadd.f32 %v141, %v144
    %vm146 = vweird.f32 %v140
    %vm147 = vweird.f32 %v141
    %vm148 = vmor %vm146, %vm147
    %v149 = vsel %vm148, %v141, %v145
    %v150 = vand.u32 2147483647, %v140
    %vm151 = vcmp.eq.f32.partialorder %v150, 8.507059e+37
    %v152 = vand.u32 %v140, 2147483648
    %v153 = vor.u32 1.1754944e-38, %v152
    %v154 = vsel %vm151, %v153, %v149
    %v155 = vmul.f32 1.0, %v154
    %v156 = vsub.f32 %v58, %v115
    %v157 = vmul.f32 %v155, %v156
    %v158 = vadd.f32 %v115, %v157
    %v159 = vmax.f32 %v158, 0.0
    %160 = vst [vmem:[#allocation8] sm:$0xff] %v159
    // Predicated region
    $region26: #{tpu_custom_call.1} parent=1 // pred_check
      _
    $region27: #{tpu_custom_call.1} parent=1 // pred_check_branch
      %162 = sbr.rel (0) target = $region29
    $region28: #{tpu_custom_call.1} parent=1 // pred_region
      %164 = vsyncadd [#allocation4], 0
      %s166 = sshll.u32 [#allocation8], 4
      %s167 = int_to_ptr.vmem [resolvable:$true] %s166
      %s168 = sshll.u32 %s3, 4
      %s169 = int_to_ptr.hbm [resolvable:$true] %s168
      %171 = dma.vmem_to_hbm [thread:$0]  %s167, 128, %s169, [#allocation4]
    $region29: #{tpu_custom_call.1} parent=1 // pred_fallthru
      _
    // Predicated region
    $region30: #{tpu_custom_call.1} parent=1 // pred_check
      _
    $region31: #{tpu_custom_call.1} parent=1 // pred_check_branch
      %173 = sbr.rel (0) target = $region33
    $region32: #{tpu_custom_call.1} parent=1 // pred_region
      %175 = dma.done [#allocation4], 128
    $region33: #{tpu_custom_call.1} parent=1 // pred_fallthru
      _
    %176 = vsyncpa [#allocation3], 1
    %177 = vsyncpa [#allocation6], 1
    %178 = vsyncpa [#allocation4], 1

</llo_original>
